<compile_context>
chip_gen: v5e
topology: v5e:2x2
jax: 0.10.0
libtpu: 0.0.40
codegen_flags: <defaults>
</compile_context>

<pallas_src>
import numpy as np
import jax
import jax.numpy as jnp
from jax.experimental import pallas as pl
from jax.experimental.pallas import tpu as pltpu


def _round_up(x, m):
    return ((x + m - 1) // m) * m


def _make_kernel(tile, steps, m_valid):
    """Kernel over packed rows.

    Each packed row holds G original rows of width D side-by-side along lanes
    (W = G*D lanes).  One MXU matmul against the constant selection matrix
    computes all G per-original-row sums at once; columns >= G are zero.
    """

    def kernel(p_ref, t_ref, sel_ref, o_ref, acc_ref):
        c = pl.program_id(0)   # core-split axis ("parallel")
        i = pl.program_id(1)   # reduction axis ("arbitrary")

        @pl.when(i == 0)
        def _():
            acc_ref[...] = jnp.zeros_like(acc_ref)

        diff = p_ref[...].astype(jnp.float32) - t_ref[...].astype(jnp.float32)
        sq = diff * diff                                           # (tile, W)

        # All G segmented sums in one MXU matmul (MXU is otherwise idle here).
        group_sums = jnp.dot(sq, sel_ref[...],
                             preferred_element_type=jnp.float32)   # (tile, 128)
        # Batched sqrt (zero columns -> sqrt(0) = 0) + single lane reduce.
        dist = jnp.sum(jnp.sqrt(group_sums), axis=-1, keepdims=True)  # (tile, 1)

        # Mask rows beyond the valid packed-row count: covers the ragged last
        # block and any clamped duplicate block.  Stale-VMEM garbage rows may
        # be NaN/Inf; jnp.where still selects 0 for them.
        gb = c * steps + i                                  # unclamped block id
        nvalid = jnp.clip(m_valid - gb * tile, 0, tile)
        row_id = jax.lax.broadcasted_iota(jnp.int32, (tile, 1), 0)
        dist = jnp.where(row_id < nvalid, dist, 0.0)

        # Per-row vector accumulator: no scalar reduce inside the loop body.
        acc_ref[...] += dist

        @pl.when(i == pl.num_programs(1) - 1)
        def _():
            o_ref[...] = jnp.broadcast_to(jnp.sum(acc_ref[...]), o_ref.shape)

    return kernel


def euclidean_loss(pred, target, target_block_rows=8192):
    """Pallas equivalent of Euclidean_loss.forward(pred, target)."""
    assert pred.shape == target.shape, "pred/target shape mismatch"
    D = int(pred.shape[-1])
    N = int(np.prod(pred.shape[:-1]))          # rows over which the mean is taken
    if N == 0:
        return jnp.float32(jnp.nan)            # matches torch.mean of empty
    itemsize = int(pred.dtype.itemsize)

    # ---- Zero-copy lane-dense packing --------------------------------------
    # G = largest group count <= 128 // D that divides N, so the reshape below
    # is a free bitcast (no pad, no prefix-slice copy in HBM).
    G = 1
    if D <= 128:
        for g in range(128 // D, 0, -1):
            if N % g == 0:
                G = g
                break
    # TODO(synk): pathological N (e.g. prime) degrades to lane-sparse G=1; a
    # masked-tail path could restore lane density at the cost of a prefix copy.
    W = G * D
    M = N // G                                 # packed rows seen by the kernel
    lane_pad = _round_up(W, 128)               # VMEM lane footprint per row

    p2 = pred.reshape(M, W)                    # free reshapes (row-major)
    t2 = target.reshape(M, W)

    # Constant 0/1 block-diagonal selection matrix (W, 128): column g selects
    # lanes [g*D, (g+1)*D); columns >= G are zero.
    sel_np = np.zeros((W, 128), dtype=np.float32)
    for g in range(G):
        sel_np[g * D:(g + 1) * D, g] = 1.0
    sel = jnp.asarray(sel_np)

    # ---- Tile sizing / VMEM budget -----------------------------------------
    # 2 inputs x 2 pipeline buffers + the lane-padded (tile,1)->(tile,128) f32
    # accumulator; ~24 MiB budget fits v7x (64 MiB VMEM) as well as v5e/v6e.
    per_row_bytes = 2 * 2 * lane_pad * itemsize + 128 * 4
    budget_rows = max(8, ((24 << 20) // per_row_bytes) // 8 * 8)
    tile_cap = min(max(8, (target_block_rows // 8) * 8), budget_rows)

    if M <= tile_cap:
        tile = M                               # single full-extent block
        steps_total = 1
    else:
        tile = tile_cap
        steps_total = pl.cdiv(M, tile)         # ragged last block handled in-kernel

    # Optional 2-way leading axis so multi-TensorCore parts can split the
    # reduction; serialized (and harmless) on single-core v5e/v6e.
    num_cores = 2 if steps_total >= 2 else 1
    steps = pl.cdiv(steps_total, num_cores)
    last_block = steps_total - 1               # index_map clamp target

    vmem_limit = int(2 * 2 * tile * lane_pad * itemsize       # input buffers
                     + tile * 128 * 4                         # lane-padded acc
                     + 2 * _round_up(W, 8) * 128 * 4          # sel buffers
                     + (2 << 20))                             # headroom
    vmem_limit = max(vmem_limit, 4 << 20)

    in_map = lambda c, i: (jnp.minimum(c * steps + i, last_block), 0)

    partials = pl.pallas_call(
        _make_kernel(tile, steps, M),
        out_shape=jax.ShapeDtypeStruct((num_cores, 1, 1), jnp.float32),
        grid_spec=pltpu.PrefetchScalarGridSpec(
            num_scalar_prefetch=0,
            grid=(num_cores, steps),
            in_specs=[
                pl.BlockSpec((tile, W), in_map),
                pl.BlockSpec((tile, W), in_map),
                pl.BlockSpec((W, 128), lambda c, i: (0, 0)),
            ],
            out_specs=pl.BlockSpec((1, 1, 1), lambda c, i: (c, 0, 0)),
            scratch_shapes=[pltpu.VMEM((tile, 1), jnp.float32)],
        ),
        compiler_params=pltpu.CompilerParams(
            dimension_semantics=("parallel", "arbitrary"),
            vmem_limit_bytes=vmem_limit,
        ),
    )(p2, t2, sel)

    # Mean over the true row count (masked rows contributed zero).
    # TODO(synk): forward only; a custom VJP would need an epsilon/mask for
    # d(sqrt)/dx at zero distance.
    return jnp.sum(partials) / jnp.float32(N)


if __name__ == "__main__":
    key = jax.random.PRNGKey(0)
    k1, k2, k3, k4 = jax.random.split(key, 4)

    def ref_loss(p, t):
        pf = p.astype(jnp.float32)
        tf = t.astype(jnp.float32)
        return jnp.mean(jnp.sqrt(jnp.sum((pf - tf) ** 2, axis=-1)))

    # 1) Small module-consistent shape: batch=2, nodes=8, hidden=32.
    pred = jax.random.normal(k1, (2, 8, 32), dtype=jnp.float32)
    target = jax.random.normal(k2, (2, 8, 32), dtype=jnp.float32)
    loss = jax.block_until_ready(euclidean_loss(pred, target))
    ref = ref_loss(pred, target)
    assert jnp.allclose(loss, ref, rtol=1e-3, atol=1e-5), (loss, ref)

    # 2) Multi-step reduction + 2-way core axis + ragged last block + clamped
    #    duplicate block (steps_total = 5 is odd with tile = 128).
    pred2 = jax.random.normal(k3, (4, 600, 32), dtype=jnp.float32)
    target2 = jax.random.normal(k4, (4, 600, 32), dtype=jnp.float32)
    loss2 = jax.block_until_ready(euclidean_loss(pred2, target2, target_block_rows=128))
    ref2 = ref_loss(pred2, target2)
    assert jnp.allclose(loss2, ref2, rtol=1e-3, atol=1e-5), (loss2, ref2)

    # 3) Non-divisor feature dim (D=7, N=15) -> divisor packing G=15, W=105.
    pred3 = jax.random.normal(k1, (3, 5, 7), dtype=jnp.float32)
    target3 = jax.random.normal(k2, (3, 5, 7), dtype=jnp.float32)
    loss3 = jax.block_until_ready(euclidean_loss(pred3, target3))
    ref3 = ref_loss(pred3, target3)
    assert jnp.allclose(loss3, ref3, rtol=1e-3, atol=1e-5), (loss3, ref3)

    print("KERNEL_OK")
</pallas_src>

<mosaic_0001>
module attributes {stable_mosaic.version = 11 : i64} {
  func.func @kernel(%arg0: i32, %arg1: i32, %arg2: memref<4x128xf32, #tpu.memory_space<vmem>>, %arg3: memref<4x128xf32, #tpu.memory_space<vmem>>, %arg4: memref<128x128xf32, #tpu.memory_space<vmem>>, %arg5: memref<1x1x1xf32, #tpu.memory_space<vmem>>, %arg6: memref<4x1xf32, #tpu.memory_space<vmem>>) attributes {dimension_semantics = [#tpu.dimension_semantics<parallel>, #tpu.dimension_semantics<arbitrary>], iteration_bounds = array<i64: 1, 1>, scalar_prefetch = 0 : i64, scratch_operands = 1 : i64, tpu.core_type = #tpu.core_type<tc>, window_params = [{transform_indices = @transform_0, window_bounds = array<i64: 4, 128>}, {transform_indices = @transform_1, window_bounds = array<i64: 4, 128>}, {pipeline_mode = #tpu.pipeline_mode<synchronous>, transform_indices = @transform_2, window_bounds = array<i64: 128, 128>}, {transform_indices = @transform_3, window_bounds = array<i64: 1, 1, 1>}]} {
    %c0_i32 = arith.constant 0 : i32
    %0 = arith.cmpi eq, %arg1, %c0_i32 : i32
    %1 = arith.extui %0 : i1 to i32
    %c0_i32_0 = arith.constant 0 : i32
    %2 = arith.cmpi ne, %1, %c0_i32_0 : i32
    scf.if %2 {
      %cst_17 = arith.constant 0.000000e+00 : f32
      %29 = vector.broadcast %cst_17 : f32 to vector<4x1xf32>
      %c0_18 = arith.constant 0 : index
      %c0_19 = arith.constant 0 : index
      %30 = vector.load %arg6[%c0_18, %c0_19] : memref<4x1xf32, #tpu.memory_space<vmem>>, vector<4x1xf32>
      tpu.vector_store %arg6[%c0_18, %c0_19], %29 {strides = array<i32>} : memref<4x1xf32, #tpu.memory_space<vmem>>, vector<4x1xf32>,
    } else {
    }
    %c0 = arith.constant 0 : index
    %c0_1 = arith.constant 0 : index
    %3 = vector.load %arg2[%c0, %c0_1] : memref<4x128xf32, #tpu.memory_space<vmem>>, vector<4x128xf32>
    %c0_2 = arith.constant 0 : index
    %c0_3 = arith.constant 0 : index
    %4 = vector.load %arg3[%c0_2, %c0_3] : memref<4x128xf32, #tpu.memory_space<vmem>>, vector<4x128xf32>
    %5 = arith.subf %3, %4 : vector<4x128xf32>
    %6 = arith.mulf %5, %5 : vector<4x128xf32>
    %c0_4 = arith.constant 0 : index
    %c0_5 = arith.constant 0 : index
    %7 = vector.load %arg4[%c0_4, %c0_5] : memref<128x128xf32, #tpu.memory_space<vmem>>, vector<128x128xf32>
    %cst = arith.constant dense<0.000000e+00> : vector<4x128xf32>
    %8 = tpu.matmul %6, %7, %cst {dimension_numbers = #tpu.dot_dimension_numbers<[1], [0], [0], [1], [0, 0, 1, 1], [], []>} : vector<4x128xf32>, vector<128x128xf32>, vector<4x128xf32> -> vector<4x128xf32>
    %9 = math.sqrt %8 : vector<4x128xf32>
    %cst_6 = arith.constant dense<0.000000e+00> : vector<4xf32>
    %10 = vector.multi_reduction <add>, %9, %cst_6 [1] : vector<4x128xf32> to vector<4xf32>
    %11 = vector.shape_cast %10 : vector<4xf32> to vector<4x1xf32>
    %c1_i32 = arith.constant 1 : i32
    %12 = arith.muli %arg0, %c1_i32 : i32
    %13 = arith.addi %12, %arg1 : i32
    %c4_i32 = arith.constant 4 : i32
    %14 = arith.muli %13, %c4_i32 : i32
    %c4_i32_7 = arith.constant 4 : i32
    %15 = arith.subi %c4_i32_7, %14 : i32
    %c0_i32_8 = arith.constant 0 : i32
    %c4_i32_9 = arith.constant 4 : i32
    %16 = arith.maxsi %c0_i32_8, %15 : i32
    %17 = arith.minsi %c4_i32_9, %16 : i32
    %18 = tpu.iota {dimensions = array<i32: 0>} : vector<4x1xi32>
    %19 = vector.broadcast %17 : i32 to vector<4x1xi32>
    %20 = arith.cmpi slt, %18, %19 : vector<4x1xi32>
    %cst_10 = arith.constant 0.000000e+00 : f32
    %21 = vector.broadcast %cst_10 : f32 to vector<4x1xf32>
    %22 = arith.select %20, %11, %21 : vector<4x1xi1>, vector<4x1xf32>
    %c0_11 = arith.constant 0 : index
    %c0_12 = arith.constant 0 : index
    %23 = vector.load %arg6[%c0_11, %c0_12] : memref<4x1xf32, #tpu.memory_space<vmem>>, vector<4x1xf32>
    %24 = arith.addf %23, %22 : vector<4x1xf32>
    %c0_13 = arith.constant 0 : index
    %c0_14 = arith.constant 0 : index
    %25 = vector.load %arg6[%c0_13, %c0_14] : memref<4x1xf32, #tpu.memory_space<vmem>>, vector<4x1xf32>
    tpu.vector_store %arg6[%c0_13, %c0_14], %24 {strides = array<i32>} : memref<4x1xf32, #tpu.memory_space<vmem>>, vector<4x1xf32>,
    %c0_i32_15 = arith.constant 0 : i32
    %26 = arith.cmpi eq, %arg1, %c0_i32_15 : i32
    %27 = arith.extui %26 : i1 to i32
    %c0_i32_16 = arith.constant 0 : i32
    %28 = arith.cmpi ne, %27, %c0_i32_16 : i32
    scf.if %28 {
      %c0_17 = arith.constant 0 : index
      %c0_18 = arith.constant 0 : index
      %29 = vector.load %arg6[%c0_17, %c0_18] : memref<4x1xf32, #tpu.memory_space<vmem>>, vector<4x1xf32>
      %30 = vector.shape_cast %29 : vector<4x1xf32> to vector<1x4x1xf32>
      %cst_19 = arith.constant dense<0.000000e+00> : vector<1xf32>
      %31 = vector.multi_reduction <add>, %30, %cst_19 [1, 2] : vector<1x4x1xf32> to vector<1xf32>
      %32 = vector.shape_cast %31 : vector<1xf32> to vector<1x1x1xf32>
      %33 = vector.extract %32[0, 0, 0] : f32 from vector<1x1x1xf32>
      %34 = vector.broadcast %33 : f32 to vector<1x1x1xf32>
      %c0_20 = arith.constant 0 : index
      %c0_21 = arith.constant 0 : index
      %c0_22 = arith.constant 0 : index
      %35 = vector.load %arg5[%c0_20, %c0_21, %c0_22] : memref<1x1x1xf32, #tpu.memory_space<vmem>>, vector<1x1x1xf32>
      tpu.vector_store %arg5[%c0_20, %c0_21, %c0_22], %34 {strides = array<i32>} : memref<1x1x1xf32, #tpu.memory_space<vmem>>, vector<1x1x1xf32>,
    } else {
    }
    return
  }
  func.func @transform_0(%arg0: i32, %arg1: i32) -> (i32, i32) {
    %c1_i32 = arith.constant 1 : i32
    %0 = arith.muli %arg0, %c1_i32 : i32
    %1 = arith.addi %0, %arg1 : i32
    %c0_i32 = arith.constant 0 : i32
    %2 = arith.minsi %1, %c0_i32 : i32
    %c0_i32_0 = arith.constant 0 : i32
    %c0_i32_1 = arith.constant 0 : i32
    return %2, %c0_i32_0 : i32, i32
  }
  func.func @transform_1(%arg0: i32, %arg1: i32) -> (i32, i32) {
    %c1_i32 = arith.constant 1 : i32
    %0 = arith.muli %arg0, %c1_i32 : i32
    %1 = arith.addi %0, %arg1 : i32
    %c0_i32 = arith.constant 0 : i32
    %2 = arith.minsi %1, %c0_i32 : i32
    %c0_i32_0 = arith.constant 0 : i32
    %c0_i32_1 = arith.constant 0 : i32
    return %2, %c0_i32_0 : i32, i32
  }
  func.func @transform_2(%arg0: i32, %arg1: i32) -> (i32, i32) {
    %c0_i32 = arith.constant 0 : i32
    %c0_i32_0 = arith.constant 0 : i32
    %c0_i32_1 = arith.constant 0 : i32
    return %c0_i32, %c0_i32_0 : i32, i32
  }
  func.func @transform_3(%arg0: i32, %arg1: i32) -> (i32, i32, i32) {
    %c0_i32 = arith.constant 0 : i32
    %c0_i32_0 = arith.constant 0 : i32
    %c0_i32_1 = arith.constant 0 : i32
    return %arg0, %c0_i32, %c0_i32_0 : i32, i32, i32
  }
}

</mosaic_0001>

<llo_original>
// kernel: tpu_custom_call.1
$region0: #{tpu_custom_call.1}
  #allocation0 [shape = 'u32[]', space=smem, size = 0x4, offset = 0x4, fixed_abs, tag = 'smem constant byte address 0x4 - core index']
  #allocation1 [shape = 'u32[72,128]{1,0:T(1,128)}', space=vmem, size = 0x9000, scoped, tag = 'internal scratch']
  #allocation2 [shape = 'f32[4,1]{1,0:T(4,128)}', space=vmem, size = 0x800, scoped, tag = 'scratch operand']
  %s0 = inlined_call_operand.hbm [shape: f32[4,128], index: 0, kind: input, shape index: {}]
  %s1 = inlined_call_operand.hbm [shape: f32[4,128], index: 1, kind: input, shape index: {}]
  %s2 = inlined_call_operand.hbm [shape: f32[128,128], index: 2, kind: input, shape index: {}]
  %s3 = inlined_call_operand.hbm [shape: f32[1,1,1], index: 3, kind: output, shape index: {}]
  %s4 = sld [smem:[#allocation0]]
  $region42: #{tpu_custom_call.1} parent=0
    _
  %s6 = ssub.s32 1, %s4
  %s7 = scalar_select 0, %s6, %s4
  $region1: #{tpu_custom_call.1} parent=0
    #allocation3 [shape = 'u8[2048]{0}', space=vmem, size = 0x800, scoped, tag = 'input window, operand 0, single buffered']
    #allocation4 [shape = 's32[1]{0}', space=sflag, size = 0x4, scoped, tag = 'scoped memory for tpu_custom_call.1']
    #allocation5 [shape = 's32[1]{0}', space=sflag, size = 0x4, scoped, tag = 'scoped memory for tpu_custom_call.1']
    #allocation6 [shape = 'u8[2048]{0}', space=vmem, size = 0x800, scoped, tag = 'input window, operand 1, single buffered']
    #allocation7 [shape = 's32[1]{0}', space=sflag, size = 0x4, scoped, tag = 'scoped memory for tpu_custom_call.1']
    #allocation8 [shape = 'u8[65536]{0}', space=vmem, size = 0x10000, scoped, tag = 'input window, operand 2, single buffered']
    #allocation9 [shape = 'u8[512]{0}', space=vmem, size = 0x400, scoped, tag = 'output window, operand 0, single buffered']
    %8 = vsyncpa [#allocation4], 0
    %9 = vsyncpa [#allocation7], 0
    %10 = vsyncpa [#allocation5], 0
    // Predicated region
    $region2: #{tpu_custom_call.1} parent=1 // pred_check
      _
    $region3: #{tpu_custom_call.1} parent=1 // pred_check_branch
      %12 = sbr.rel (0) target = $region5
    $region4: #{tpu_custom_call.1} parent=1 // pred_region
      %s13 = sadd.s32 0, 0
      %p14 = scmp.lt.s32.totalorder %s13, 0
      %s15 = scalar_select %p14, %s13, 0
      %17 = vsyncadd [#allocation4], 0
      %s18 = smul.addr %s15, 4
      %s19 = scalar_lea.hbm %s0, %s18
      %s21 = sshll.u32 %s19, 4
      %s22 = int_to_ptr.hbm [resolvable:$true] %s21
      %s23 = sshll.u32 [#allocation3], 4
      %s24 = int_to_ptr.vmem [resolvable:$true] %s23
      %26 = dma.hbm_to_vmem [thread:$0]  %s22, 64, %s24, [#allocation4]
    $region5: #{tpu_custom_call.1} parent=1 // pred_fallthru
      _
    // Predicated region
    $region6: #{tpu_custom_call.1} parent=1 // pred_check
      _
    $region7: #{tpu_custom_call.1} parent=1 // pred_check_branch
      %28 = sbr.rel (0) target = $region9
    $region8: #{tpu_custom_call.1} parent=1 // pred_region
      %s29 = sadd.s32 0, 0
      %p30 = scmp.lt.s32.totalorder %s29, 0
      %s31 = scalar_select %p30, %s29, 0
      %33 = vsyncadd [#allocation7], 0
      %s34 = smul.addr %s31, 4
      %s35 = scalar_lea.hbm %s1, %s34
      %s37 = sshll.u32 %s35, 4
      %s38 = int_to_ptr.hbm [resolvable:$true] %s37
      %s39 = sshll.u32 [#allocation6], 4
      %s40 = int_to_ptr.vmem [resolvable:$true] %s39
      %42 = dma.hbm_to_vmem [thread:$0]  %s38, 64, %s40, [#allocation7]
    $region9: #{tpu_custom_call.1} parent=1 // pred_fallthru
      _
    // Predicated region
    $region10: #{tpu_custom_call.1} parent=1 // pred_check
      _
    $region11: #{tpu_custom_call.1} parent=1 // pred_check_branch
      %44 = sbr.rel (0) target = $region13
    $region12: #{tpu_custom_call.1} parent=1 // pred_region
      %46 = vsyncadd [#allocation7], 0
      %s47 = sshll.u32 %s2, 4
      %s48 = int_to_ptr.hbm [resolvable:$true] %s47
      %s49 = sshll.u32 [#allocation8], 4
      %s50 = int_to_ptr.vmem [resolvable:$true] %s49
      %55 = dma.hbm_to_vmem [thread:$0]  %s48, 2048, %s50, [#allocation7], 128, 128, 8
    $region13: #{tpu_custom_call.1} parent=1 // pred_fallthru
      _
    // Predicated region
    $region14: #{tpu_custom_call.1} parent=1 // pred_check
      _
    $region15: #{tpu_custom_call.1} parent=1 // pred_check_branch
      %57 = sbr.rel (0) target = $region17
    $region16: #{tpu_custom_call.1} parent=1 // pred_region
      %59 = dma.done [#allocation4], 64
    $region17: #{tpu_custom_call.1} parent=1 // pred_fallthru
      _
    // Predicated region
    $region18: #{tpu_custom_call.1} parent=1 // pred_check
      _
    $region19: #{tpu_custom_call.1} parent=1 // pred_check_branch
      %61 = sbr.rel (0) target = $region21
    $region20: #{tpu_custom_call.1} parent=1 // pred_region
      %63 = dma.done [#allocation7], 64
    $region21: #{tpu_custom_call.1} parent=1 // pred_fallthru
      _
    // Predicated region
    $region22: #{tpu_custom_call.1} parent=1 // pred_check
      _
    $region23: #{tpu_custom_call.1} parent=1 // pred_check_branch
      %65 = sbr.rel (0) target = $region25
    $region24: #{tpu_custom_call.1} parent=1 // pred_region
      %67 = dma.done [#allocation7], 2048
    $region25: #{tpu_custom_call.1} parent=1 // pred_fallthru
      _
    %s68 = sadd.s32 0, 0
    %p69 = scmp.lt.s32.totalorder %s68, 0
    %s70 = scalar_select %p69, %s68, 0
    %s71 = sadd.s32 0, 0
    %p72 = scmp.lt.s32.totalorder %s71, 0
    %s73 = scalar_select %p72, %s71, 0
    %p74 = scmp.eq.s32.totalorder 0, 0
    // Predicated region
    $region26: #{tpu_custom_call.1} parent=1 // pred_check
      %p75 = pneg %p74
    $region27: #{tpu_custom_call.1} parent=1 // pred_check_branch
      %77 = sbr.rel (%p75) target = $region29
    $region28: #{tpu_custom_call.1} parent=1 // pred_region
      %vm78 = vcmask 3072
      %79 = vst.msk [vmem:[#allocation2] sm:$0xf] %vm78, 0.0
    $region29: #{tpu_custom_call.1} parent=1 // pred_fallthru
      _
    %v80 = vld [vmem:[#allocation3] sm:$0xf]
    %v81 = vld [vmem:[#allocation6] sm:$0xf]
    %v82 = vsub.f32 %v80, %v81
    %v83 = vmul.f32 %v82, %v82
    %v84 = vld [vmem:[#allocation8] sm:$0xff]
    %v85 = vld [vmem:[#allocation8 + $0x8] sm:$0xff]
    %v86 = vld [vmem:[#allocation8 + $0x10] sm:$0xff]
    %v87 = vld [vmem:[#allocation8 + $0x18] sm:$0xff]
    %v88 = vld [vmem:[#allocation8 + $0x20] sm:$0xff]
    %v89 = vld [vmem:[#allocation8 + $0x28] sm:$0xff]
    %v90 = vld [vmem:[#allocation8 + $0x30] sm:$0xff]
    %v91 = vld [vmem:[#allocation8 + $0x38] sm:$0xff]
    %v92 = vld [vmem:[#allocation8 + $0x40] sm:$0xff]
    %v93 = vld [vmem:[#allocation8 + $0x48] sm:$0xff]
    %v94 = vld [vmem:[#allocation8 + $0x50] sm:$0xff]
    %v95 = vld [vmem:[#allocation8 + $0x58] sm:$0xff]
    %v96 = vld [vmem:[#allocation8 + $0x60] sm:$0xff]
    %v97 = vld [vmem:[#allocation8 + $0x68] sm:$0xff]
    %v98 = vld [vmem:[#allocation8 + $0x70] sm:$0xff]
    %v99 = vld [vmem:[#allocation8 + $0x78] sm:$0xff]
    %100 = vmatpush.msra.mxu0 %v99
    %101 = vmatpush.msra.mxu0 %v98
    %102 = vmatpush.msra.mxu0 %v97
    %103 = vmatpush.msra.mxu0 %v96
    %104 = vmatpush.msra.mxu0 %v95
    %105 = vmatpush.msra.mxu0 %v94
    %106 = vmatpush.msra.mxu0 %v93
    %107 = vmatpush.msra.mxu0 %v92
    %108 = vmatpush.msra.mxu0 %v91
    %109 = vmatpush.msra.mxu0 %v90
    %110 = vmatpush.msra.mxu0 %v89
    %111 = vmatpush.msra.mxu0 %v88
    %112 = vmatpush.msra.mxu0 %v87
    %113 = vmatpush.msra.mxu0 %v86
    %114 = vmatpush.msra.mxu0 %v85
    %115 = vmatpush.msra.mxu0 %v84
    %116 = vmatmul.f32.gmra.mxu0 %v83
    %v117 = vpop.f32.mrf.mxu0
    %v118 = vadd.f32 0.0, %v117
    %119 = vdwg.mxu0
    %v120 = vrsqrt.pop %v118
    %v121 = vmul.f32 %v120, %v118
    %v122 = vmul.f32 %v121, %v120
    %v123 = vmul.f32 0.5, %v122
    %v124 = vsub.f32 1.5, %v123
    %v125 = vmul.f32 %v120, %v124
    %v126 = vmul.f32 %v118, %v125
    %vm127 = vcmp.eq.f32.partialorder %v118, inf
    %v128 = vsel %vm127, %v118, %v126
    %vm129 = vcmp.eq.f32.partialorder %v118, 0.0
    %v130 = vand.u32 %v118, 2147483648
    %v131 = vsel %vm129, %v130, %v128
    %vm132 = vcmask 1043456
    %v133 = vsel %vm132, %v131, 0.0
    %134 = vadd.xlane.f32.xlu0 %v133
    %v135 = vpop.xlane.xlu0 %134
    %s136 = sadd.s32 0, 0
    %s137 = smul.u32 %s136, 4
    %s138 = ssub.s32 4, %s137
    %p139 = scmp.gt.s32.totalorder %s138, 0
    %s140 = scalar_select %p139, %s138, 0
    %p141 = scmp.lt.s32.totalorder %s140, 4
    %s142 = scalar_select %p141, %s140, 4
    %v143 = vlaneseq
    %v144 = vshrl.u32 %v143, 7
    %v145 = vstv %s142
    %vm146 = vcmp.lt.s32.totalorder %v144, %v145
    %v147 = vsel %vm146, %v135, 0.0
    %v148 = vld [vmem:[#allocation2] sm:$0xf]
    %v149 = vadd.f32 %v148, %v147
    %vm150 = vcmask 3072
    %151 = vst.msk [vmem:[#allocation2] sm:$0xf] %vm150, %v149
    // Predicated region
    $region30: #{tpu_custom_call.1} parent=1 // pred_check
      %p152 = pneg %p74
    $region31: #{tpu_custom_call.1} parent=1 // pred_check_branch
      %154 = sbr.rel (%p152) target = $region33
    $region32: #{tpu_custom_call.1} parent=1 // pred_region
      %v155 = vld [vmem:[#allocation2] sm:$0xf]
      %v156 = vsel %vm150, %v155, 0.0
      %157 = vadd.xlane.f32.xlu0 %v156
      %v158 = vpop.xlane.xlu0 %157
      %v159 = vrot.slane %v158, 4
      %v160 = vadd.f32 %v158, %v159
      %v161 = vrot.slane %v160, 2
      %v162 = vadd.f32 %v160, %v161
      %v163 = vrot.slane %v162, 1
      %v164 = vadd.f32 %v162, %v163
      %s165 = vtos %v164
      %v166 = vstv %s165
      %vm167 = vcmask 0
      %168 = vst.msk [vmem:[#allocation9] sm:$0x1] %vm167, %v166
    $region33: #{tpu_custom_call.1} parent=1 // pred_fallthru
      _
    // Predicated region
    $region34: #{tpu_custom_call.1} parent=1 // pred_check
      _
    $region35: #{tpu_custom_call.1} parent=1 // pred_check_branch
      %170 = sbr.rel (0) target = $region37
    $region36: #{tpu_custom_call.1} parent=1 // pred_region
      %172 = vsyncadd [#allocation5], 0
      %s174 = sshll.u32 [#allocation9], 4
      %s175 = int_to_ptr.vmem [resolvable:$true] %s174
      %s176 = sshll.u32 %s3, 4
      %s177 = int_to_ptr.hbm [resolvable:$true] %s176
      %179 = dma.vmem_to_hbm [thread:$0]  %s175, 16, %s177, [#allocation5]
    $region37: #{tpu_custom_call.1} parent=1 // pred_fallthru
      _
    // Predicated region
    $region38: #{tpu_custom_call.1} parent=1 // pred_check
      _
    $region39: #{tpu_custom_call.1} parent=1 // pred_check_branch
      %181 = sbr.rel (0) target = $region41
    $region40: #{tpu_custom_call.1} parent=1 // pred_region
      %183 = dma.done [#allocation5], 16
    $region41: #{tpu_custom_call.1} parent=1 // pred_fallthru
      _
    %184 = vsyncpa [#allocation4], 1
    %185 = vsyncpa [#allocation7], 1
    %186 = vsyncpa [#allocation5], 1

</llo_original>
